<compile_context>
chip_gen: v7x
topology: tpu7x:2x2x1
jax: 0.10.0
libtpu: 0.0.40
codegen_flags: <defaults>
</compile_context>

<pallas_src>
import functools

import jax
import jax.numpy as jnp
from jax.experimental import pallas as pl
from jax.experimental.pallas import tpu as pltpu

_LANE = 128          # lane-dense padding multiple
_VMEM_BUDGET = 16 * 1024 * 1024   # conservative: fits every generation's scoped default
_NEG_FILL = -1.0e11  # matches torch .fill_(-100000000000.0)


def _round_up(n, m):
    return ((n + m - 1) // m) * m


def _lwf_mlp_kernel(n_layers, n_outputs_real, off_ref, *refs):
    """Fused padded MLP forward + (gated) per-task class masking.

    off_ref : SMEM int32[2] = (offset1, offset2)  class-mask window.
    refs    = (x_ref, w0_ref, b0_ref, ..., w{L-1}_ref, b{L-1}_ref, out_ref)
    """
    in_refs = refs[:-1]
    out_ref = refs[-1]

    h = in_refs[0][...]
    for li in range(n_layers):
        w = in_refs[1 + 2 * li][...]
        if h.dtype != w.dtype:
            h = h.astype(w.dtype)          # keep bf16 weights bf16 into the MXU
        acc = jnp.dot(h, w, preferred_element_type=jnp.float32)
        acc = acc + in_refs[2 + 2 * li][...].astype(jnp.float32)   # (1, pout) bias
        if li < n_layers - 1:
            h = jnp.maximum(acc, 0.0)      # ReLU between layers (f32)
        else:
            h = acc

    out_ref[...] = h.astype(out_ref.dtype)

    # Per-task class masking: only pay the iota/compare/select cost when the
    # mask is non-trivial (for the non-CIFAR branch off1==0, off2==n_outputs).
    @pl.when((off_ref[0] > 0) | (off_ref[1] < n_outputs_real))
    def _():
        col = jax.lax.broadcasted_iota(jnp.int32, out_ref.shape, 1)
        mask = (col < off_ref[0]) | (col >= off_ref[1])
        out_ref[...] = jnp.where(mask,
                                 jnp.asarray(_NEG_FILL, out_ref.dtype),
                                 out_ref[...])


def _vmem_footprint_bytes(tile_m, pdims, itemsize):
    n_layers = len(pdims) - 1
    resident = sum(pdims[i] * pdims[i + 1] + pdims[i + 1]
                   for i in range(n_layers)) * itemsize
    io = 2 * tile_m * (pdims[0] + pdims[-1]) * itemsize       # double-buffered tiles
    interm = 2 * tile_m * max(pdims) * 4                      # f32 intermediates headroom
    return resident + io + interm


def lwf_net_forward(x, weights, biases, offset1, offset2, *, max_tile_m=256):
    """Pallas implementation of Net.forward(x, t) for the MLP branch."""
    assert len(weights) == len(biases)
    n_layers = len(weights)
    batch, n_inputs = x.shape
    n_outputs = weights[-1].shape[1]
    itemsize = jnp.dtype(x.dtype).itemsize

    # Lane-dense padded layer widths (multiples of 128).
    dims = [n_inputs] + [w.shape[1] for w in weights]
    pdims = [_round_up(d, _LANE) for d in dims]

    # Batch tile: multiple of 8 (sublane), capped, shrunk to fit VMEM budget.
    tile_m = max_tile_m if batch >= max_tile_m else _round_up(max(batch, 1), 8)
    while tile_m > 8 and _vmem_footprint_bytes(tile_m, pdims, itemsize) > _VMEM_BUDGET:
        tile_m //= 2
    tile_m = max(tile_m, 8)
    pbatch = _round_up(batch, tile_m)
    grid = (pbatch // tile_m,)

    # Zero-pad operands (zeros in padded rows/cols are exact no-ops through
    # Linear + ReLU; padded output columns are sliced off below).
    xp = jnp.zeros((pbatch, pdims[0]), x.dtype).at[:batch, :n_inputs].set(x)
    operands = [xp]
    in_specs = [pl.BlockSpec((tile_m, pdims[0]), lambda i, off: (i, 0))]
    for li, (w, b) in enumerate(zip(weights, biases)):
        pin, pout = pdims[li], pdims[li + 1]
        wp = jnp.zeros((pin, pout), w.dtype).at[:w.shape[0], :w.shape[1]].set(w)
        bp = jnp.zeros((1, pout), b.dtype).at[0, :b.shape[0]].set(b)
        operands.append(wp)
        operands.append(bp)
        # Weights / biases resident in VMEM across all grid steps.
        in_specs.append(pl.BlockSpec((pin, pout), lambda i, off: (0, 0)))
        in_specs.append(pl.BlockSpec((1, pout), lambda i, off: (0, 0)))

    out_spec = pl.BlockSpec((tile_m, pdims[-1]), lambda i, off: (i, 0))

    offsets = jnp.array([offset1, offset2], dtype=jnp.int32)

    flops = 2 * pbatch * sum(pdims[i] * pdims[i + 1] for i in range(n_layers))
    bytes_accessed = (
        sum(pdims[i] * pdims[i + 1] + pdims[i + 1] for i in range(n_layers)) * itemsize
        + pbatch * (pdims[0] + pdims[-1]) * itemsize)
    cost = pl.CostEstimate(flops=int(flops), transcendentals=0,
                           bytes_accessed=int(bytes_accessed))

    kernel = functools.partial(_lwf_mlp_kernel, n_layers, n_outputs)

    out_padded = pl.pallas_call(
        kernel,
        out_shape=jax.ShapeDtypeStruct((pbatch, pdims[-1]), jnp.float32),
        grid_spec=pltpu.PrefetchScalarGridSpec(
            num_scalar_prefetch=1,
            grid=grid,
            in_specs=in_specs,
            out_specs=out_spec,
        ),
        compiler_params=pltpu.CompilerParams(
            dimension_semantics=("parallel",)),
        cost_estimate=cost,
    )(offsets, *operands)

    return out_padded[:batch, :n_outputs]


def _reference_forward(x, weights, biases, offset1, offset2):
    h = x.astype(jnp.float32)
    for li, (w, b) in enumerate(zip(weights, biases)):
        h = h @ w + b
        if li < len(weights) - 1:
            h = jnp.maximum(h, 0.0)
    col = jnp.arange(h.shape[1])[None, :]
    return jnp.where((col < offset1) | (col >= offset2), _NEG_FILL, h)


if __name__ == "__main__":
    # Small shapes consistent with the module:
    #   n_inputs=64, args.n_hiddens=32, args.n_layers=2, n_outputs=16, batch=2
    batch, n_inputs, n_hiddens, n_layers_mlp, n_outputs = 2, 64, 32, 2, 16
    layer_sizes = [n_inputs] + [n_hiddens] * n_layers_mlp + [n_outputs]

    key = jax.random.PRNGKey(0)
    keys = jax.random.split(key, 2 * len(layer_sizes))

    weights, biases = [], []
    for li in range(len(layer_sizes) - 1):
        fan_in, fan_out = layer_sizes[li], layer_sizes[li + 1]
        w = jax.random.normal(keys[2 * li], (fan_in, fan_out), jnp.float32) * 0.1
        b = jax.random.normal(keys[2 * li + 1], (fan_out,), jnp.float32) * 0.1
        weights.append(w)
        biases.append(b)

    x = jax.random.normal(keys[-1], (batch, n_inputs), jnp.float32)

    # Non-CIFAR branch: nc_per_task == n_outputs -> offsets (0, n_outputs),
    # mask is a no-op (kernel skips the masking work via pl.when).
    out = lwf_net_forward(x, weights, biases, 0, n_outputs)
    out = jax.block_until_ready(out)
    ref = _reference_forward(x, weights, biases, 0, n_outputs)
    assert out.shape == (batch, n_outputs)
    assert jnp.allclose(out, ref, atol=1e-4, rtol=1e-4)

    # Also exercise the non-trivial mask path (CIFAR-style per-task window).
    out_m = lwf_net_forward(x, weights, biases, 4, 12)
    out_m = jax.block_until_ready(out_m)
    ref_m = _reference_forward(x, weights, biases, 4, 12)
    assert jnp.allclose(out_m, ref_m, atol=1e-4, rtol=1e-4)

    # TODO(synk): the CIFAR (ResNet18) branch of self.net is not implemented;
    # only the MLP branch used for non-'cifar100.pt' data is translated.
    print("KERNEL_OK")
</pallas_src>

<mosaic_0001>
module attributes {stable_mosaic.version = 11 : i64} {
  func.func @_lwf_mlp_kernel(%arg0: i32, %arg1: memref<2xi32, #tpu.memory_space<smem>>, %arg2: memref<8x128xf32, #tpu.memory_space<vmem>>, %arg3: memref<128x128xf32, #tpu.memory_space<vmem>>, %arg4: memref<1x128xf32, #tpu.memory_space<vmem>>, %arg5: memref<128x128xf32, #tpu.memory_space<vmem>>, %arg6: memref<1x128xf32, #tpu.memory_space<vmem>>, %arg7: memref<128x128xf32, #tpu.memory_space<vmem>>, %arg8: memref<1x128xf32, #tpu.memory_space<vmem>>, %arg9: memref<8x128xf32, #tpu.memory_space<vmem>>) attributes {dimension_semantics = [#tpu.dimension_semantics<parallel>], iteration_bounds = array<i64: 1>, scalar_prefetch = 1 : i64, scratch_operands = 0 : i64, tpu.core_type = #tpu.core_type<tc>, window_params = [{transform_indices = @transform_0, window_bounds = array<i64: 8, 128>}, {pipeline_mode = #tpu.pipeline_mode<synchronous>, transform_indices = @transform_1, window_bounds = array<i64: 128, 128>}, {pipeline_mode = #tpu.pipeline_mode<synchronous>, transform_indices = @transform_2, window_bounds = array<i64: 1, 128>}, {pipeline_mode = #tpu.pipeline_mode<synchronous>, transform_indices = @transform_3, window_bounds = array<i64: 128, 128>}, {pipeline_mode = #tpu.pipeline_mode<synchronous>, transform_indices = @transform_4, window_bounds = array<i64: 1, 128>}, {pipeline_mode = #tpu.pipeline_mode<synchronous>, transform_indices = @transform_5, window_bounds = array<i64: 128, 128>}, {pipeline_mode = #tpu.pipeline_mode<synchronous>, transform_indices = @transform_6, window_bounds = array<i64: 1, 128>}, {transform_indices = @transform_7, window_bounds = array<i64: 8, 128>}]} {
    %c0 = arith.constant 0 : index
    %c0_0 = arith.constant 0 : index
    %0 = vector.load %arg2[%c0, %c0_0] : memref<8x128xf32, #tpu.memory_space<vmem>>, vector<8x128xf32>
    %c0_1 = arith.constant 0 : index
    %c0_2 = arith.constant 0 : index
    %1 = vector.load %arg3[%c0_1, %c0_2] : memref<128x128xf32, #tpu.memory_space<vmem>>, vector<128x128xf32>
    %cst = arith.constant dense<0.000000e+00> : vector<8x128xf32>
    %2 = tpu.matmul %0, %1, %cst {dimension_numbers = #tpu.dot_dimension_numbers<[1], [0], [0], [1], [0, 0, 1, 1], [], []>} : vector<8x128xf32>, vector<128x128xf32>, vector<8x128xf32> -> vector<8x128xf32>
    %c0_3 = arith.constant 0 : index
    %c0_4 = arith.constant 0 : index
    %3 = vector.load %arg4[%c0_3, %c0_4] : memref<1x128xf32, #tpu.memory_space<vmem>>, vector<1x128xf32>
    %4 = vector.broadcast %3 : vector<1x128xf32> to vector<8x128xf32>
    %5 = arith.addf %2, %4 : vector<8x128xf32>
    %cst_5 = arith.constant 0.000000e+00 : f32
    %6 = vector.broadcast %cst_5 : f32 to vector<8x128xf32>
    %7 = arith.maximumf %5, %6 : vector<8x128xf32>
    %c0_6 = arith.constant 0 : index
    %c0_7 = arith.constant 0 : index
    %8 = vector.load %arg5[%c0_6, %c0_7] : memref<128x128xf32, #tpu.memory_space<vmem>>, vector<128x128xf32>
    %cst_8 = arith.constant dense<0.000000e+00> : vector<8x128xf32>
    %9 = tpu.matmul %7, %8, %cst_8 {dimension_numbers = #tpu.dot_dimension_numbers<[1], [0], [0], [1], [0, 0, 1, 1], [], []>} : vector<8x128xf32>, vector<128x128xf32>, vector<8x128xf32> -> vector<8x128xf32>
    %c0_9 = arith.constant 0 : index
    %c0_10 = arith.constant 0 : index
    %10 = vector.load %arg6[%c0_9, %c0_10] : memref<1x128xf32, #tpu.memory_space<vmem>>, vector<1x128xf32>
    %11 = vector.broadcast %10 : vector<1x128xf32> to vector<8x128xf32>
    %12 = arith.addf %9, %11 : vector<8x128xf32>
    %cst_11 = arith.constant 0.000000e+00 : f32
    %13 = vector.broadcast %cst_11 : f32 to vector<8x128xf32>
    %14 = arith.maximumf %12, %13 : vector<8x128xf32>
    %c0_12 = arith.constant 0 : index
    %c0_13 = arith.constant 0 : index
    %15 = vector.load %arg7[%c0_12, %c0_13] : memref<128x128xf32, #tpu.memory_space<vmem>>, vector<128x128xf32>
    %cst_14 = arith.constant dense<0.000000e+00> : vector<8x128xf32>
    %16 = tpu.matmul %14, %15, %cst_14 {dimension_numbers = #tpu.dot_dimension_numbers<[1], [0], [0], [1], [0, 0, 1, 1], [], []>} : vector<8x128xf32>, vector<128x128xf32>, vector<8x128xf32> -> vector<8x128xf32>
    %c0_15 = arith.constant 0 : index
    %c0_16 = arith.constant 0 : index
    %17 = vector.load %arg8[%c0_15, %c0_16] : memref<1x128xf32, #tpu.memory_space<vmem>>, vector<1x128xf32>
    %18 = vector.broadcast %17 : vector<1x128xf32> to vector<8x128xf32>
    %19 = arith.addf %16, %18 : vector<8x128xf32>
    %c0_17 = arith.constant 0 : index
    %c0_18 = arith.constant 0 : index
    %20 = vector.load %arg9[%c0_17, %c0_18] : memref<8x128xf32, #tpu.memory_space<vmem>>, vector<8x128xf32>
    tpu.vector_store %arg9[%c0_17, %c0_18], %19 {strides = array<i32>} : memref<8x128xf32, #tpu.memory_space<vmem>>, vector<8x128xf32>,
    %c0_19 = arith.constant 0 : index
    %21 = memref.load %arg1[%c0_19] : memref<2xi32, #tpu.memory_space<smem>>
    %c0_i32 = arith.constant 0 : i32
    %22 = arith.cmpi sgt, %21, %c0_i32 : i32
    %c1 = arith.constant 1 : index
    %23 = memref.load %arg1[%c1] : memref<2xi32, #tpu.memory_space<smem>>
    %c16_i32 = arith.constant 16 : i32
    %24 = arith.cmpi slt, %23, %c16_i32 : i32
    %25 = arith.ori %22, %24 : i1
    %26 = arith.extui %25 : i1 to i32
    %c0_i32_20 = arith.constant 0 : i32
    %27 = arith.cmpi ne, %26, %c0_i32_20 : i32
    scf.if %27 {
      %28 = tpu.iota {dimensions = array<i32: 1>} : vector<8x128xi32>
      %c0_21 = arith.constant 0 : index
      %29 = memref.load %arg1[%c0_21] : memref<2xi32, #tpu.memory_space<smem>>
      %30 = vector.broadcast %29 : i32 to vector<8x128xi32>
      %31 = arith.cmpi slt, %28, %30 : vector<8x128xi32>
      %c1_22 = arith.constant 1 : index
      %32 = memref.load %arg1[%c1_22] : memref<2xi32, #tpu.memory_space<smem>>
      %33 = vector.broadcast %32 : i32 to vector<8x128xi32>
      %34 = arith.cmpi sge, %28, %33 : vector<8x128xi32>
      %35 = arith.ori %31, %34 : vector<8x128xi1>
      %c0_23 = arith.constant 0 : index
      %c0_24 = arith.constant 0 : index
      %36 = vector.load %arg9[%c0_23, %c0_24] : memref<8x128xf32, #tpu.memory_space<vmem>>, vector<8x128xf32>
      %cst_25 = arith.constant -9.99999979E+10 : f32
      %37 = vector.broadcast %cst_25 : f32 to vector<8x128xf32>
      %38 = arith.select %35, %37, %36 : vector<8x128xi1>, vector<8x128xf32>
      %c0_26 = arith.constant 0 : index
      %c0_27 = arith.constant 0 : index
      %39 = vector.load %arg9[%c0_26, %c0_27] : memref<8x128xf32, #tpu.memory_space<vmem>>, vector<8x128xf32>
      tpu.vector_store %arg9[%c0_26, %c0_27], %38 {strides = array<i32>} : memref<8x128xf32, #tpu.memory_space<vmem>>, vector<8x128xf32>,
    } else {
    }
    return
  }
  func.func @transform_0(%arg0: i32, %arg1: memref<2xi32, #tpu.memory_space<smem>>) -> (i32, i32) {
    %c0_i32 = arith.constant 0 : i32
    %c0_i32_0 = arith.constant 0 : i32
    return %arg0, %c0_i32 : i32, i32
  }
  func.func @transform_1(%arg0: i32, %arg1: memref<2xi32, #tpu.memory_space<smem>>) -> (i32, i32) {
    %c0_i32 = arith.constant 0 : i32
    %c0_i32_0 = arith.constant 0 : i32
    %c0_i32_1 = arith.constant 0 : i32
    return %c0_i32, %c0_i32_0 : i32, i32
  }
  func.func @transform_2(%arg0: i32, %arg1: memref<2xi32, #tpu.memory_space<smem>>) -> (i32, i32) {
    %c0_i32 = arith.constant 0 : i32
    %c0_i32_0 = arith.constant 0 : i32
    %c0_i32_1 = arith.constant 0 : i32
    return %c0_i32, %c0_i32_0 : i32, i32
  }
  func.func @transform_3(%arg0: i32, %arg1: memref<2xi32, #tpu.memory_space<smem>>) -> (i32, i32) {
    %c0_i32 = arith.constant 0 : i32
    %c0_i32_0 = arith.constant 0 : i32
    %c0_i32_1 = arith.constant 0 : i32
    return %c0_i32, %c0_i32_0 : i32, i32
  }
  func.func @transform_4(%arg0: i32, %arg1: memref<2xi32, #tpu.memory_space<smem>>) -> (i32, i32) {
    %c0_i32 = arith.constant 0 : i32
    %c0_i32_0 = arith.constant 0 : i32
    %c0_i32_1 = arith.constant 0 : i32
    return %c0_i32, %c0_i32_0 : i32, i32
  }
  func.func @transform_5(%arg0: i32, %arg1: memref<2xi32, #tpu.memory_space<smem>>) -> (i32, i32) {
    %c0_i32 = arith.constant 0 : i32
    %c0_i32_0 = arith.constant 0 : i32
    %c0_i32_1 = arith.constant 0 : i32
    return %c0_i32, %c0_i32_0 : i32, i32
  }
  func.func @transform_6(%arg0: i32, %arg1: memref<2xi32, #tpu.memory_space<smem>>) -> (i32, i32) {
    %c0_i32 = arith.constant 0 : i32
    %c0_i32_0 = arith.constant 0 : i32
    %c0_i32_1 = arith.constant 0 : i32
    return %c0_i32, %c0_i32_0 : i32, i32
  }
  func.func @transform_7(%arg0: i32, %arg1: memref<2xi32, #tpu.memory_space<smem>>) -> (i32, i32) {
    %c0_i32 = arith.constant 0 : i32
    %c0_i32_0 = arith.constant 0 : i32
    return %arg0, %c0_i32 : i32, i32
  }
}

</mosaic_0001>

<llo_original>
// kernel: tpu_custom_call.1
$region0: #{tpu_custom_call.1}
  #allocation0 [shape = 'u32[]', space=smem, size = 0x4, offset = 0x4, fixed_abs, tag = 'smem constant byte address 0x4 - core index']
  #allocation1 [shape = 'u32[144,128]{1,0:T(1,128)}', space=vmem, size = 0x12000, scoped, tag = 'internal scratch']
  #allocation2 [shape = 's32[1]{0}', space=sflag, size = 0x4, scoped, tag = 'scoped memory for tpu_custom_call.1']
  #allocation3 [shape = 'u8[512]{0}', space=smem, size = 0x200, scoped, tag = 'prefetched SMEM operand 0']
  %s0 = inlined_call_operand.hbm [shape: s32[2], index: 0, kind: input, shape index: {}]
  %s1 = inlined_call_operand.hbm [shape: f32[8,128], index: 1, kind: input, shape index: {}]
  %s2 = inlined_call_operand.hbm [shape: f32[128,128], index: 2, kind: input, shape index: {}]
  %s3 = inlined_call_operand.vmem [shape: f32[1,128], index: 3, kind: input, shape index: {}]
  %s4 = inlined_call_operand.hbm [shape: f32[128,128], index: 4, kind: input, shape index: {}]
  %s5 = inlined_call_operand.vmem [shape: f32[1,128], index: 5, kind: input, shape index: {}]
  %s6 = inlined_call_operand.hbm [shape: f32[128,128], index: 6, kind: input, shape index: {}]
  %s7 = inlined_call_operand.vmem [shape: f32[1,128], index: 7, kind: input, shape index: {}]
  %s8 = inlined_call_operand.hbm [shape: f32[8,128], index: 8, kind: output, shape index: {}]
  %s9 = sld [smem:[#allocation0]]
  $region58: #{tpu_custom_call.1} parent=0
    _
  %s11 = ssub.s32 1, %s9
  %s12 = scalar_select 0, %s11, %s9
  %14 = dma.hbm_to_smem %s0, 16, [#allocation3], [#allocation2]
  %15 = dma.done [#allocation2], 16
  %16 = sfence
  $region1: #{tpu_custom_call.1} parent=0
    #allocation4 [shape = 'u8[4096]{0}', space=vmem, size = 0x1000, scoped, tag = 'input window, operand 1, single buffered']
    #allocation5 [shape = 's32[1]{0}', space=sflag, size = 0x4, scoped, tag = 'scoped memory for tpu_custom_call.1']
    #allocation6 [shape = 's32[1]{0}', space=sflag, size = 0x4, scoped, tag = 'scoped memory for tpu_custom_call.1']
    #allocation7 [shape = 'u8[65536]{0}', space=vmem, size = 0x10000, scoped, tag = 'input window, operand 2, single buffered']
    #allocation8 [shape = 's32[1]{0}', space=sflag, size = 0x4, scoped, tag = 'scoped memory for tpu_custom_call.1']
    #allocation9 [shape = 'u8[65536]{0}', space=vmem, size = 0x10000, scoped, tag = 'input window, operand 4, single buffered']
    #allocation10 [shape = 'u8[65536]{0}', space=vmem, size = 0x10000, scoped, tag = 'input window, operand 6, single buffered']
    #allocation11 [shape = 's32[1]{0}', space=sflag, size = 0x4, scoped, tag = 'scoped memory for tpu_custom_call.1']
    #allocation12 [shape = 'u8[4096]{0}', space=vmem, size = 0x1000, scoped, tag = 'output window, operand 0, single buffered']
    %17 = vsyncpa [#allocation5], 0
    %18 = vsyncpa [#allocation8], 0
    %19 = vsyncpa [#allocation11], 0
    %20 = vsyncpa [#allocation6], 0
    // Predicated region
    $region2: #{tpu_custom_call.1} parent=1 // pred_check
      _
    $region3: #{tpu_custom_call.1} parent=1 // pred_check_branch
      %22 = sbr.rel (0) target = $region5
    $region4: #{tpu_custom_call.1} parent=1 // pred_region
      %s24 = ssub.s32 128, 128
      %25 = vsyncadd [#allocation5], %s24
      %s27 = sshll.u32 [#allocation4], 4
      %s28 = int_to_ptr.vmem [resolvable:$true] %s27
      %30 = dma.hbm_to_vmem [thread:$0]  %s1, 128, %s28, [#allocation5]
    $region5: #{tpu_custom_call.1} parent=1 // pred_fallthru
      _
    // Predicated region
    $region6: #{tpu_custom_call.1} parent=1 // pred_check
      _
    $region7: #{tpu_custom_call.1} parent=1 // pred_check_branch
      %32 = sbr.rel (0) target = $region9
    $region8: #{tpu_custom_call.1} parent=1 // pred_region
      %s34 = ssub.s32 2048, 2048
      %35 = vsyncadd [#allocation8], %s34
      %s36 = sshll.u32 [#allocation7], 4
      %s37 = int_to_ptr.vmem [resolvable:$true] %s36
      %42 = dma.hbm_to_vmem [thread:$0]  %s2, 2048, %s37, [#allocation8], 128, 128, 8
    $region9: #{tpu_custom_call.1} parent=1 // pred_fallthru
      _
    // Predicated region
    $region10: #{tpu_custom_call.1} parent=1 // pred_check
      _
    $region11: #{tpu_custom_call.1} parent=1 // pred_check_branch
      %44 = sbr.rel (0) target = $region13
    $region12: #{tpu_custom_call.1} parent=1 // pred_region
      _
    $region13: #{tpu_custom_call.1} parent=1 // pred_fallthru
      _
    // Predicated region
    $region14: #{tpu_custom_call.1} parent=1 // pred_check
      _
    $region15: #{tpu_custom_call.1} parent=1 // pred_check_branch
      %46 = sbr.rel (0) target = $region17
    $region16: #{tpu_custom_call.1} parent=1 // pred_region
      %s48 = ssub.s32 2048, 2048
      %49 = vsyncadd [#allocation8], %s48
      %s50 = sshll.u32 [#allocation9], 4
      %s51 = int_to_ptr.vmem [resolvable:$true] %s50
      %56 = dma.hbm_to_vmem [thread:$0]  %s4, 2048, %s51, [#allocation8], 128, 128, 8
    $region17: #{tpu_custom_call.1} parent=1 // pred_fallthru
      _
    // Predicated region
    $region18: #{tpu_custom_call.1} parent=1 // pred_check
      _
    $region19: #{tpu_custom_call.1} parent=1 // pred_check_branch
      %58 = sbr.rel (0) target = $region21
    $region20: #{tpu_custom_call.1} parent=1 // pred_region
      _
    $region21: #{tpu_custom_call.1} parent=1 // pred_fallthru
      _
    // Predicated region
    $region22: #{tpu_custom_call.1} parent=1 // pred_check
      _
    $region23: #{tpu_custom_call.1} parent=1 // pred_check_branch
      %60 = sbr.rel (0) target = $region25
    $region24: #{tpu_custom_call.1} parent=1 // pred_region
      %s62 = ssub.s32 2048, 2048
      %63 = vsyncadd [#allocation11], %s62
      %s64 = sshll.u32 [#allocation10], 4
      %s65 = int_to_ptr.vmem [resolvable:$true] %s64
      %70 = dma.hbm_to_vmem [thread:$0]  %s6, 2048, %s65, [#allocation11], 128, 128, 8
    $region25: #{tpu_custom_call.1} parent=1 // pred_fallthru
      _
    // Predicated region
    $region26: #{tpu_custom_call.1} parent=1 // pred_check
      _
    $region27: #{tpu_custom_call.1} parent=1 // pred_check_branch
      %72 = sbr.rel (0) target = $region29
    $region28: #{tpu_custom_call.1} parent=1 // pred_region
      _
    $region29: #{tpu_custom_call.1} parent=1 // pred_fallthru
      _
    // Predicated region
    $region30: #{tpu_custom_call.1} parent=1 // pred_check
      _
    $region31: #{tpu_custom_call.1} parent=1 // pred_check_branch
      %74 = sbr.rel (0) target = $region33
    $region32: #{tpu_custom_call.1} parent=1 // pred_region
      %75 = dma.done [#allocation5], 128
    $region33: #{tpu_custom_call.1} parent=1 // pred_fallthru
      _
    // Predicated region
    $region34: #{tpu_custom_call.1} parent=1 // pred_check
      _
    $region35: #{tpu_custom_call.1} parent=1 // pred_check_branch
      %77 = sbr.rel (0) target = $region37
    $region36: #{tpu_custom_call.1} parent=1 // pred_region
      %78 = dma.done [#allocation8], 2048
    $region37: #{tpu_custom_call.1} parent=1 // pred_fallthru
      _
    // Predicated region
    $region38: #{tpu_custom_call.1} parent=1 // pred_check
      _
    $region39: #{tpu_custom_call.1} parent=1 // pred_check_branch
      %80 = sbr.rel (0) target = $region41
    $region40: #{tpu_custom_call.1} parent=1 // pred_region
      %81 = dma.done [#allocation8], 2048
    $region41: #{tpu_custom_call.1} parent=1 // pred_fallthru
      _
    // Predicated region
    $region42: #{tpu_custom_call.1} parent=1 // pred_check
      _
    $region43: #{tpu_custom_call.1} parent=1 // pred_check_branch
      %83 = sbr.rel (0) target = $region45
    $region44: #{tpu_custom_call.1} parent=1 // pred_region
      %84 = dma.done [#allocation11], 2048
    $region45: #{tpu_custom_call.1} parent=1 // pred_fallthru
      _
    %v85 = vld [vmem:[#allocation4] sm:$0xff]
    %v86 = vld [vmem:[#allocation7] sm:$0xff]
    %v87 = vld [vmem:[#allocation7 + $0x8] sm:$0xff]
    %v88 = vld [vmem:[#allocation7 + $0x10] sm:$0xff]
    %v89 = vld [vmem:[#allocation7 + $0x18] sm:$0xff]
    %v90 = vld [vmem:[#allocation7 + $0x20] sm:$0xff]
    %v91 = vld [vmem:[#allocation7 + $0x28] sm:$0xff]
    %v92 = vld [vmem:[#allocation7 + $0x30] sm:$0xff]
    %v93 = vld [vmem:[#allocation7 + $0x38] sm:$0xff]
    %v94 = vld [vmem:[#allocation7 + $0x40] sm:$0xff]
    %v95 = vld [vmem:[#allocation7 + $0x48] sm:$0xff]
    %v96 = vld [vmem:[#allocation7 + $0x50] sm:$0xff]
    %v97 = vld [vmem:[#allocation7 + $0x58] sm:$0xff]
    %v98 = vld [vmem:[#allocation7 + $0x60] sm:$0xff]
    %v99 = vld [vmem:[#allocation7 + $0x68] sm:$0xff]
    %v100 = vld [vmem:[#allocation7 + $0x70] sm:$0xff]
    %v101 = vld [vmem:[#allocation7 + $0x78] sm:$0xff]
    %v102 = vld [vmem:[%s3] sm:$0x1]
    %v104 = vlaneseq
    %v105 = vshrl.u32 %v104, 7
    %v106 = vsub.s32 0, %v105
    %v107 = vrot.slane %v102, %v106
    %109 = vmatprep.subr.mxu0 0.0
    %110 = vmatpush1.msra.mxu0 %v86
    %111 = vmatprep.subr.mxu0 0.0
    %112 = vmatpush1.msra.mxu0 %v87
    %113 = vmatprep.subr.mxu0 0.0
    %114 = vmatpush1.msra.mxu0 %v88
    %115 = vmatprep.subr.mxu0 0.0
    %116 = vmatpush1.msra.mxu0 %v89
    %117 = vmatprep.subr.mxu0 0.0
    %118 = vmatpush1.msra.mxu0 %v90
    %119 = vmatprep.subr.mxu0 0.0
    %120 = vmatpush1.msra.mxu0 %v91
    %121 = vmatprep.subr.mxu0 0.0
    %122 = vmatpush1.msra.mxu0 %v92
    %123 = vmatprep.subr.mxu0 0.0
    %124 = vmatpush1.msra.mxu0 %v93
    %125 = vmatprep.subr.mxu0 0.0
    %126 = vmatpush1.msra.mxu0 %v94
    %127 = vmatprep.subr.mxu0 0.0
    %128 = vmatpush1.msra.mxu0 %v95
    %129 = vmatprep.subr.mxu0 0.0
    %130 = vmatpush1.msra.mxu0 %v96
    %131 = vmatprep.subr.mxu0 0.0
    %132 = vmatpush1.msra.mxu0 %v97
    %133 = vmatprep.subr.mxu0 0.0
    %134 = vmatpush1.msra.mxu0 %v98
    %135 = vmatprep.subr.mxu0 0.0
    %136 = vmatpush1.msra.mxu0 %v99
    %137 = vmatprep.subr.mxu0 0.0
    %138 = vmatpush1.msra.mxu0 %v100
    %139 = vmatprep.subr.mxu0 0.0
    %140 = vmatpush1.msra.mxu0 %v101
    %141 = vmatprep.subr.mxu0 0.0
    %142 = vmatpush1.msra.mxu0 0.0
    %143 = vmatprep.subr.mxu0 0.0
    %144 = vmatpush1.msra.mxu0 0.0
    %145 = vmatprep.subr.mxu0 0.0
    %146 = vmatpush1.msra.mxu0 0.0
    %147 = vmatprep.subr.mxu0 0.0
    %148 = vmatpush1.msra.mxu0 0.0
    %149 = vmatprep.subr.mxu0 0.0
    %150 = vmatpush1.msra.mxu0 0.0
    %151 = vmatprep.subr.mxu0 0.0
    %152 = vmatpush1.msra.mxu0 0.0
    %153 = vmatprep.subr.mxu0 0.0
    %154 = vmatpush1.msra.mxu0 0.0
    %155 = vmatprep.subr.mxu0 0.0
    %156 = vmatpush1.msra.mxu0 0.0
    %157 = vmatprep.subr.mxu0 0.0
    %158 = vmatpush1.msra.mxu0 0.0
    %159 = vmatprep.subr.mxu0 0.0
    %160 = vmatpush1.msra.mxu0 0.0
    %161 = vmatprep.subr.mxu0 0.0
    %162 = vmatpush1.msra.mxu0 0.0
    %163 = vmatprep.subr.mxu0 0.0
    %164 = vmatpush1.msra.mxu0 0.0
    %165 = vmatprep.subr.mxu0 0.0
    %166 = vmatpush1.msra.mxu0 0.0
    %167 = vmatprep.subr.mxu0 0.0
    %168 = vmatpush1.msra.mxu0 0.0
    %169 = vmatprep.subr.mxu0 0.0
    %170 = vmatpush1.msra.mxu0 0.0
    %171 = vmatprep.subr.mxu0 0.0
    %172 = vmatpush1.msra.mxu0 0.0
    %173 = vmatprep.mubr.f32.mxu0 0.0
    %174 = vmatmul.mubr.f32.gmra.mrb[0].mxu0 %v85
    %v175 = vpop.f32.mrb[0].mxu0
    %v176 = vadd.f32 %v107, %v175
    %v177 = vpop.f32.mrb[0].mxu0
    %178 = vdwg.mxu0
    %v179 = vmax.f32 %v176, 0.0
    %v180 = vld [vmem:[#allocation9] sm:$0xff]
    %v181 = vld [vmem:[#allocation9 + $0x8] sm:$0xff]
    %v182 = vld [vmem:[#allocation9 + $0x10] sm:$0xff]
    %v183 = vld [vmem:[#allocation9 + $0x18] sm:$0xff]
    %v184 = vld [vmem:[#allocation9 + $0x20] sm:$0xff]
    %v185 = vld [vmem:[#allocation9 + $0x28] sm:$0xff]
    %v186 = vld [vmem:[#allocation9 + $0x30] sm:$0xff]
    %v187 = vld [vmem:[#allocation9 + $0x38] sm:$0xff]
    %v188 = vld [vmem:[#allocation9 + $0x40] sm:$0xff]
    %v189 = vld [vmem:[#allocation9 + $0x48] sm:$0xff]
    %v190 = vld [vmem:[#allocation9 + $0x50] sm:$0xff]
    %v191 = vld [vmem:[#allocation9 + $0x58] sm:$0xff]
    %v192 = vld [vmem:[#allocation9 + $0x60] sm:$0xff]
    %v193 = vld [vmem:[#allocation9 + $0x68] sm:$0xff]
    %v194 = vld [vmem:[#allocation9 + $0x70] sm:$0xff]
    %v195 = vld [vmem:[#allocation9 + $0x78] sm:$0xff]
    %v196 = vld [vmem:[%s5] sm:$0x1]
    %v198 = vlaneseq
    %v199 = vshrl.u32 %v198, 7
    %v200 = vsub.s32 0, %v199
    %v201 = vrot.slane %v196, %v200
    %203 = vmatprep.subr.mxu0 0.0
    %204 = vmatpush1.msra.mxu0 %v180
    %205 = vmatprep.subr.mxu0 0.0
    %206 = vmatpush1.msra.mxu0 %v181
    %207 = vmatprep.subr.mxu0 0.0
    %208 = vmatpush1.msra.mxu0 %v182
    %209 = vmatprep.subr.mxu0 0.0
    %210 = vmatpush1.msra.mxu0 %v183
    %211 = vmatprep.subr.mxu0 0.0
    %212 = vmatpush1.msra.mxu0 %v184
    %213 = vmatprep.subr.mxu0 0.0
    %214 = vmatpush1.msra.mxu0 %v185
    %215 = vmatprep.subr.mxu0 0.0
    %216 = vmatpush1.msra.mxu0 %v186
    %217 = vmatprep.subr.mxu0 0.0
    %218 = vmatpush1.msra.mxu0 %v187
    %219 = vmatprep.subr.mxu0 0.0
    %220 = vmatpush1.msra.mxu0 %v188
    %221 = vmatprep.subr.mxu0 0.0
    %222 = vmatpush1.msra.mxu0 %v189
    %223 = vmatprep.subr.mxu0 0.0
    %224 = vmatpush1.msra.mxu0 %v190
    %225 = vmatprep.subr.mxu0 0.0
    %226 = vmatpush1.msra.mxu0 %v191
    %227 = vmatprep.subr.mxu0 0.0
    %228 = vmatpush1.msra.mxu0 %v192
    %229 = vmatprep.subr.mxu0 0.0
    %230 = vmatpush1.msra.mxu0 %v193
    %231 = vmatprep.subr.mxu0 0.0
    %232 = vmatpush1.msra.mxu0 %v194
    %233 = vmatprep.subr.mxu0 0.0
    %234 = vmatpush1.msra.mxu0 %v195
    %235 = vmatprep.subr.mxu0 0.0
    %236 = vmatpush1.msra.mxu0 0.0
    %237 = vmatprep.subr.mxu0 0.0
    %238 = vmatpush1.msra.mxu0 0.0
    %239 = vmatprep.subr.mxu0 0.0
    %240 = vmatpush1.msra.mxu0 0.0
    %241 = vmatprep.subr.mxu0 0.0
    %242 = vmatpush1.msra.mxu0 0.0
    %243 = vmatprep.subr.mxu0 0.0
    %244 = vmatpush1.msra.mxu0 0.0
    %245 = vmatprep.subr.mxu0 0.0
    %246 = vmatpush1.msra.mxu0 0.0
    %247 = vmatprep.subr.mxu0 0.0
    %248 = vmatpush1.msra.mxu0 0.0
    %249 = vmatprep.subr.mxu0 0.0
    %250 = vmatpush1.msra.mxu0 0.0
    %251 = vmatprep.subr.mxu0 0.0
    %252 = vmatpush1.msra.mxu0 0.0
    %253 = vmatprep.subr.mxu0 0.0
    %254 = vmatpush1.msra.mxu0 0.0
    %255 = vmatprep.subr.mxu0 0.0
    %256 = vmatpush1.msra.mxu0 0.0
    %257 = vmatprep.subr.mxu0 0.0
    %258 = vmatpush1.msra.mxu0 0.0
    %259 = vmatprep.subr.mxu0 0.0
    %260 = vmatpush1.msra.mxu0 0.0
    %261 = vmatprep.subr.mxu0 0.0
    %262 = vmatpush1.msra.mxu0 0.0
    %263 = vmatprep.subr.mxu0 0.0
    %264 = vmatpush1.msra.mxu0 0.0
    %265 = vmatprep.subr.mxu0 0.0
    %266 = vmatpush1.msra.mxu0 0.0
    %267 = vmatprep.mubr.f32.mxu0 0.0
    %268 = vmatmul.mubr.f32.gmra.mrb[0].mxu0 %v179
    %v269 = vpop.f32.mrb[0].mxu0
    %v270 = vadd.f32 %v201, %v269
    %v271 = vpop.f32.mrb[0].mxu0
    %272 = vdwg.mxu0
    %v273 = vmax.f32 %v270, 0.0
    %v274 = vld [vmem:[#allocation10] sm:$0xff]
    %v275 = vld [vmem:[#allocation10 + $0x8] sm:$0xff]
    %v276 = vld [vmem:[#allocation10 + $0x10] sm:$0xff]
    %v277 = vld [vmem:[#allocation10 + $0x18] sm:$0xff]
    %v278 = vld [vmem:[#allocation10 + $0x20] sm:$0xff]
    %v279 = vld [vmem:[#allocation10 + $0x28] sm:$0xff]
    %v280 = vld [vmem:[#allocation10 + $0x30] sm:$0xff]
    %v281 = vld [vmem:[#allocation10 + $0x38] sm:$0xff]
    %v282 = vld [vmem:[#allocation10 + $0x40] sm:$0xff]
    %v283 = vld [vmem:[#allocation10 + $0x48] sm:$0xff]
    %v284 = vld [vmem:[#allocation10 + $0x50] sm:$0xff]
    %v285 = vld [vmem:[#allocation10 + $0x58] sm:$0xff]
    %v286 = vld [vmem:[#allocation10 + $0x60] sm:$0xff]
    %v287 = vld [vmem:[#allocation10 + $0x68] sm:$0xff]
    %v288 = vld [vmem:[#allocation10 + $0x70] sm:$0xff]
    %v289 = vld [vmem:[#allocation10 + $0x78] sm:$0xff]
    %v290 = vld [vmem:[%s7] sm:$0x1]
    %v292 = vlaneseq
    %v293 = vshrl.u32 %v292, 7
    %v294 = vsub.s32 0, %v293
    %v295 = vrot.slane %v290, %v294
    %297 = vmatprep.subr.mxu0 0.0
    %298 = vmatpush1.msra.mxu0 %v274
    %299 = vmatprep.subr.mxu0 0.0
    %300 = vmatpush1.msra.mxu0 %v275
    %301 = vmatprep.subr.mxu0 0.0
    %302 = vmatpush1.msra.mxu0 %v276
    %303 = vmatprep.subr.mxu0 0.0
    %304 = vmatpush1.msra.mxu0 %v277
    %305 = vmatprep.subr.mxu0 0.0
    %306 = vmatpush1.msra.mxu0 %v278
    %307 = vmatprep.subr.mxu0 0.0
    %308 = vmatpush1.msra.mxu0 %v279
    %309 = vmatprep.subr.mxu0 0.0
    %310 = vmatpush1.msra.mxu0 %v280
    %311 = vmatprep.subr.mxu0 0.0
    %312 = vmatpush1.msra.mxu0 %v281
    %313 = vmatprep.subr.mxu0 0.0
    %314 = vmatpush1.msra.mxu0 %v282
    %315 = vmatprep.subr.mxu0 0.0
    %316 = vmatpush1.msra.mxu0 %v283
    %317 = vmatprep.subr.mxu0 0.0
    %318 = vmatpush1.msra.mxu0 %v284
    %319 = vmatprep.subr.mxu0 0.0
    %320 = vmatpush1.msra.mxu0 %v285
    %321 = vmatprep.subr.mxu0 0.0
    %322 = vmatpush1.msra.mxu0 %v286
    %323 = vmatprep.subr.mxu0 0.0
    %324 = vmatpush1.msra.mxu0 %v287
    %325 = vmatprep.subr.mxu0 0.0
    %326 = vmatpush1.msra.mxu0 %v288
    %327 = vmatprep.subr.mxu0 0.0
    %328 = vmatpush1.msra.mxu0 %v289
    %329 = vmatprep.subr.mxu0 0.0
    %330 = vmatpush1.msra.mxu0 0.0
    %331 = vmatprep.subr.mxu0 0.0
    %332 = vmatpush1.msra.mxu0 0.0
    %333 = vmatprep.subr.mxu0 0.0
    %334 = vmatpush1.msra.mxu0 0.0
    %335 = vmatprep.subr.mxu0 0.0
    %336 = vmatpush1.msra.mxu0 0.0
    %337 = vmatprep.subr.mxu0 0.0
    %338 = vmatpush1.msra.mxu0 0.0
    %339 = vmatprep.subr.mxu0 0.0
    %340 = vmatpush1.msra.mxu0 0.0
    %341 = vmatprep.subr.mxu0 0.0
    %342 = vmatpush1.msra.mxu0 0.0
    %343 = vmatprep.subr.mxu0 0.0
    %344 = vmatpush1.msra.mxu0 0.0
    %345 = vmatprep.subr.mxu0 0.0
    %346 = vmatpush1.msra.mxu0 0.0
    %347 = vmatprep.subr.mxu0 0.0
    %348 = vmatpush1.msra.mxu0 0.0
    %349 = vmatprep.subr.mxu0 0.0
    %350 = vmatpush1.msra.mxu0 0.0
    %351 = vmatprep.subr.mxu0 0.0
    %352 = vmatpush1.msra.mxu0 0.0
    %353 = vmatprep.subr.mxu0 0.0
    %354 = vmatpush1.msra.mxu0 0.0
    %355 = vmatprep.subr.mxu0 0.0
    %356 = vmatpush1.msra.mxu0 0.0
    %357 = vmatprep.subr.mxu0 0.0
    %358 = vmatpush1.msra.mxu0 0.0
    %359 = vmatprep.subr.mxu0 0.0
    %360 = vmatpush1.msra.mxu0 0.0
    %361 = vmatprep.mubr.f32.mxu0 0.0
    %362 = vmatmul.mubr.f32.gmra.mrb[0].mxu0 %v273
    %v363 = vpop.f32.mrb[0].mxu0
    %v364 = vadd.f32 %v295, %v363
    %v365 = vpop.f32.mrb[0].mxu0
    %366 = vdwg.mxu0
    %367 = vst [vmem:[#allocation12] sm:$0xff] %v364
    %s368 = sld [smem:[#allocation3]]
    %p369 = scmp.gt.s32.totalorder %s368, 0
    %s370 = sld [smem:[#allocation3 + $0x1]]
    %p371 = scmp.lt.s32.totalorder %s370, 16
    %p372 = por %p369, %p371
    // Predicated region
    $region46: #{tpu_custom_call.1} parent=1 // pred_check
      %p373 = pneg %p372
    $region47: #{tpu_custom_call.1} parent=1 // pred_check_branch
      %375 = sbr.rel (%p373) target = $region49
    $region48: #{tpu_custom_call.1} parent=1 // pred_region
      %v376 = vlaneseq
      %v377 = vand.u32 %v376, 127
      %s378 = sld [smem:[#allocation3]]
      %v379 = vstv %s378
      %vm380 = vcmp.lt.s32.totalorder %v377, %v379
      %s381 = sld [smem:[#allocation3 + $0x1]]
      %v382 = vstv %s381
      %vm383 = vcmp.ge.s32.totalorder %v377, %v382
      %vm384 = vmor %vm380, %vm383
      %v385 = vld [vmem:[#allocation12] sm:$0xff]
      %v386 = vsel %vm384, -1e+11, %v385
      %387 = vst [vmem:[#allocation12] sm:$0xff] %v386
    $region49: #{tpu_custom_call.1} parent=1 // pred_fallthru
      _
    // Predicated region
    $region50: #{tpu_custom_call.1} parent=1 // pred_check
      _
    $region51: #{tpu_custom_call.1} parent=1 // pred_check_branch
      %389 = sbr.rel (0) target = $region53
    $region52: #{tpu_custom_call.1} parent=1 // pred_region
      %s391 = ssub.s32 128, 128
      %392 = vsyncadd [#allocation6], %s391
      %s394 = sshll.u32 [#allocation12], 4
      %s395 = int_to_ptr.vmem [resolvable:$true] %s394
      %397 = dma.vmem_to_hbm [thread:$0]  %s395, 128, %s8, [#allocation6]
    $region53: #{tpu_custom_call.1} parent=1 // pred_fallthru
      _
    // Predicated region
    $region54: #{tpu_custom_call.1} parent=1 // pred_check
      _
    $region55: #{tpu_custom_call.1} parent=1 // pred_check_branch
      %399 = sbr.rel (0) target = $region57
    $region56: #{tpu_custom_call.1} parent=1 // pred_region
      %400 = dma.done [#allocation6], 128
    $region57: #{tpu_custom_call.1} parent=1 // pred_fallthru
      _
    %401 = vsyncpa [#allocation5], 1
    %402 = vsyncpa [#allocation8], 1
    %403 = vsyncpa [#allocation11], 1
    %404 = vsyncpa [#allocation6], 1

</llo_original>
